<compile_context>
chip_gen: v5e
topology: v5e:2x2
jax: 0.10.0
libtpu: 0.0.40
codegen_flags: <defaults>
</compile_context>

<pallas_src>
import functools
import math

import jax
import jax.numpy as jnp
from jax.experimental import pallas as pl
from jax.experimental.pallas import tpu as pltpu


def _round_up(x, m):
    return ((x + m - 1) // m) * m


def _fold_tile(x, acc_rows):
    """Tree-sum a (TR, L) tile into (acc_rows, 128) with vreg-aligned VALU adds."""
    tr, lanes = x.shape
    parts = [x[r:r + acc_rows, l:l + 128]
             for r in range(0, tr, acc_rows)
             for l in range(0, lanes, 128)]
    while len(parts) > 1:
        nxt = [parts[j] + parts[j + 1] for j in range(0, len(parts) - 1, 2)]
        if len(parts) % 2 == 1:
            nxt.append(parts[-1])
        parts = nxt
    return parts[0]


def _combined_loss_kernel(pred_ref, targ_ref, out_ref, acc_ref, *,
                          n_channels, inv_reg, final_scale, row_tile,
                          lane_tile, acc_rows, steps_per_core, n_full_blocks,
                          n_valid_elems):
    c = pl.program_id(0)            # core split (outer axis)
    i = pl.program_id(1)            # streaming reduction axis (inner)
    n_inner = pl.num_programs(1)

    @pl.when(i == 0)
    def _init():
        acc_ref[...] = jnp.zeros_like(acc_ref)

    p = pred_ref[...].astype(jnp.float32)   # (TR, L), lane-dense
    t = targ_ref[...].astype(jnp.float32)

    # Channel id depends only on the lane index because n_channels | lane_tile.
    lane = jax.lax.broadcasted_iota(jnp.int32, (1, lane_tile), 1)
    is_cls = (lane % n_channels) == 0        # (1, L), broadcasts over rows

    # Stable BCEWithLogits and squared error computed everywhere; the select
    # routes channel 0 to BCE and channels 1: to (pre-weighted) MSE.
    bce = jnp.maximum(p, 0.0) - p * t + jnp.log1p(jnp.exp(-jnp.abs(p)))
    d = p - t
    contrib = jnp.where(is_cls, bce, (d * d) * inv_reg)   # (TR, L)

    gb = c * steps_per_core + i              # global row-block index

    # Steady-state blocks: all elements valid, mask-free accumulate.
    @pl.when(gb < n_full_blocks)
    def _full():
        acc_ref[...] += _fold_tile(contrib, acc_rows)

    # Trailing block(s) containing the zero-padded tail: NaN-safe masked path.
    @pl.when(gb >= n_full_blocks)
    def _tail():
        row = jax.lax.broadcasted_iota(jnp.int32, (row_tile, lane_tile), 0)
        col = jax.lax.broadcasted_iota(jnp.int32, (row_tile, lane_tile), 1)
        flat = (gb * row_tile + row) * lane_tile + col
        masked = jnp.where(flat < n_valid_elems, contrib, 0.0)
        acc_ref[...] += _fold_tile(masked, acc_rows)

    @pl.when(i == n_inner - 1)
    def _finalize():
        # Single cross-lane reduce + mean scaling, once per core.
        out_ref[0, 0] = jnp.sum(acc_ref[...]) * final_scale


def combined_loss(predictions, targets, *, target_tile_bytes=2 * 1024 * 1024,
                  num_cores=2, core_parallel=False):
    """predictions, targets: (B, S, C). Returns scalar float32 combined loss.

    combined = ( BCEWithLogits(pred[...,0], targ[...,0]).mean()
               + MSE(pred[...,1:], targ[...,1:]).mean() ) / 2
    """
    B, S, C = predictions.shape
    assert targets.shape == predictions.shape
    assert C >= 2, "need channel 0 for BCE and channels 1: for MSE"

    N = B * S                 # per-channel element count (BCE mean divisor)
    M = N * C                 # total elements in the flat stream

    itemsize = jnp.dtype(predictions.dtype).itemsize
    sub = {4: 8, 2: 16, 1: 32}.get(itemsize, 8)   # sublane multiple per dtype

    # Lane width: multiple of both C (channel == lane % C) and 128.
    L = (C * 128) // math.gcd(C, 128)
    rows_needed = pl.cdiv(M, L)

    # Row tile: big enough that each step moves ~2 * target_tile_bytes of HBM
    # (amortizes per-step overhead), capped at the problem size.
    tile_elems = max(target_tile_bytes // itemsize, sub * L)
    row_tile = min(tile_elems // L, _round_up(rows_needed, sub))
    row_tile = max(sub, (row_tile // sub) * sub)
    if row_tile > 512:
        row_tile = (row_tile // 512) * 512   # keep accumulator to (512, 128)
        acc_rows = 512
    else:
        acc_rows = row_tile

    row_blocks = pl.cdiv(rows_needed, row_tile)
    n_cores = max(1, min(num_cores, row_blocks))
    steps_per_core = pl.cdiv(row_blocks, n_cores)
    total_blocks = n_cores * steps_per_core

    rows_padded = total_blocks * row_tile
    m_padded = rows_padded * L
    assert m_padded < 2**31, "int32 flat-index math in the tail mask"

    n_full_blocks = M // (row_tile * L)      # blocks with no padded elements

    # Row-major flatten (layout-preserving); only the tail is zero-padded,
    # and only when the shapes don't already line up.
    flat_p = predictions.reshape(-1)
    flat_t = targets.reshape(-1)
    if m_padded != M:
        flat_p = jnp.pad(flat_p, (0, m_padded - M))
        flat_t = jnp.pad(flat_t, (0, m_padded - M))
    pred2d = flat_p.reshape(rows_padded, L)
    targ2d = flat_t.reshape(rows_padded, L)

    kernel = functools.partial(
        _combined_loss_kernel,
        n_channels=C,
        inv_reg=1.0 / (C - 1),
        final_scale=0.5 / N,
        row_tile=row_tile,
        lane_tile=L,
        acc_rows=acc_rows,
        steps_per_core=steps_per_core,
        n_full_blocks=n_full_blocks,
        n_valid_elems=M)

    in_map = lambda c, i: (c * steps_per_core + i, 0)

    if core_parallel:            # v7x: guarantee one half per TensorCore
        dims = (pltpu.CORE_PARALLEL, pltpu.ARBITRARY)
    else:
        dims = ("parallel", "arbitrary")

    partials = pl.pallas_call(
        kernel,
        out_shape=jax.ShapeDtypeStruct((n_cores, 1), jnp.float32),
        grid_spec=pltpu.PrefetchScalarGridSpec(
            num_scalar_prefetch=0,
            grid=(n_cores, steps_per_core),
            in_specs=[
                pl.BlockSpec((row_tile, L), in_map),
                pl.BlockSpec((row_tile, L), in_map),
            ],
            out_specs=pl.BlockSpec((1, 1), lambda c, i: (c, 0),
                                   memory_space=pltpu.SMEM),
            scratch_shapes=[
                pltpu.VMEM((acc_rows, 128), jnp.float32),
            ],
        ),
        compiler_params=pltpu.CompilerParams(dimension_semantics=dims),
        cost_estimate=pl.CostEstimate(
            flops=10 * M,
            transcendentals=2 * M,
            bytes_accessed=2 * m_padded * itemsize + 4 * n_cores),
    )(pred2d, targ2d)

    return jnp.sum(partials)


def _reference(predictions, targets):
    # Pure-JAX reference mirroring the PyTorch semantics.
    x0 = predictions[:, :, 0].astype(jnp.float32)
    t0 = targets[:, :, 0].astype(jnp.float32)
    bce = jnp.maximum(x0, 0.0) - x0 * t0 + jnp.log1p(jnp.exp(-jnp.abs(x0)))
    loss1 = jnp.mean(bce)
    xr = predictions[:, :, 1:].astype(jnp.float32)
    tr = targets[:, :, 1:].astype(jnp.float32)
    loss2 = jnp.mean((xr - tr) ** 2)
    return (loss1 + loss2) / 2.0


if __name__ == "__main__":
    key = jax.random.PRNGKey(0)
    B, S, C = 2, 8, 4
    k1, k2, k3 = jax.random.split(key, 3)

    predictions = jax.random.normal(k1, (B, S, C), dtype=jnp.float32)
    # targets: channel 0 is a probability in [0,1] (BCE), rest are regression
    targ_cls = jax.random.uniform(k2, (B, S, 1), dtype=jnp.float32)
    targ_reg = jax.random.normal(k3, (B, S, C - 1), dtype=jnp.float32)
    targets = jnp.concatenate([targ_cls, targ_reg], axis=-1)

    out = jax.block_until_ready(combined_loss(predictions, targets))
    ref = jax.block_until_ready(_reference(predictions, targets))
    assert jnp.allclose(out, ref, rtol=1e-5, atol=1e-5), (out, ref)

    print("KERNEL_OK")
</pallas_src>

<mosaic_0001>
module attributes {stable_mosaic.version = 11 : i64} {
  func.func @_combined_loss_kernel(%arg0: i32, %arg1: i32, %arg2: memref<8x128xf32, #tpu.memory_space<vmem>>, %arg3: memref<8x128xf32, #tpu.memory_space<vmem>>, %arg4: memref<1x1xf32, #tpu.memory_space<smem>>, %arg5: memref<8x128xf32, #tpu.memory_space<vmem>>) attributes {dimension_semantics = [#tpu.dimension_semantics<parallel>, #tpu.dimension_semantics<arbitrary>], iteration_bounds = array<i64: 1, 1>, scalar_prefetch = 0 : i64, scratch_operands = 1 : i64, tpu.core_type = #tpu.core_type<tc>, window_params = [{transform_indices = @transform_0, window_bounds = array<i64: 8, 128>}, {transform_indices = @transform_1, window_bounds = array<i64: 8, 128>}, {transform_indices = @transform_2, window_bounds = array<i64: 1, 1>}]} {
    %c0_i32 = arith.constant 0 : i32
    %0 = arith.cmpi eq, %arg1, %c0_i32 : i32
    %1 = arith.extui %0 : i1 to i32
    %c0_i32_0 = arith.constant 0 : i32
    %2 = arith.cmpi ne, %1, %c0_i32_0 : i32
    scf.if %2 {
      %cst_18 = arith.constant 0.000000e+00 : f32
      %52 = vector.broadcast %cst_18 : f32 to vector<8x128xf32>
      %c0_19 = arith.constant 0 : index
      %c0_20 = arith.constant 0 : index
      %53 = vector.load %arg5[%c0_19, %c0_20] : memref<8x128xf32, #tpu.memory_space<vmem>>, vector<8x128xf32>
      tpu.vector_store %arg5[%c0_19, %c0_20], %52 {strides = array<i32>} : memref<8x128xf32, #tpu.memory_space<vmem>>, vector<8x128xf32>,
    } else {
    }
    %c0 = arith.constant 0 : index
    %c0_1 = arith.constant 0 : index
    %3 = vector.load %arg2[%c0, %c0_1] : memref<8x128xf32, #tpu.memory_space<vmem>>, vector<8x128xf32>
    %c0_2 = arith.constant 0 : index
    %c0_3 = arith.constant 0 : index
    %4 = vector.load %arg3[%c0_2, %c0_3] : memref<8x128xf32, #tpu.memory_space<vmem>>, vector<8x128xf32>
    %5 = tpu.iota {dimensions = array<i32: 1>} : vector<1x128xi32>
    %c4_i32 = arith.constant 4 : i32
    %c0_i32_4 = arith.constant 0 : i32
    %6 = arith.cmpi eq, %c4_i32, %c0_i32_4 : i32
    %c1_i32 = arith.constant 1 : i32
    %7 = arith.select %6, %c1_i32, %c4_i32 : i32
    %8 = vector.broadcast %7 : i32 to vector<1x128xi32>
    %9 = arith.remsi %5, %8 : vector<1x128xi32>
    %c0_i32_5 = arith.constant 0 : i32
    %10 = vector.broadcast %c0_i32_5 : i32 to vector<1x128xi32>
    %11 = arith.cmpi ne, %9, %10 : vector<1x128xi32>
    %c0_i32_6 = arith.constant 0 : i32
    %12 = vector.broadcast %c0_i32_6 : i32 to vector<1x128xi32>
    %13 = arith.cmpi slt, %9, %12 : vector<1x128xi32>
    %c0_i32_7 = arith.constant 0 : i32
    %14 = arith.cmpi slt, %7, %c0_i32_7 : i32
    %15 = vector.broadcast %14 : i1 to vector<1x128xi1>
    %16 = vector.broadcast %15 : vector<1x128xi1> to vector<1x128xi1>
    %17 = arith.xori %13, %16 : vector<1x128xi1>
    %18 = arith.andi %17, %11 : vector<1x128xi1>
    %19 = vector.broadcast %7 : i32 to vector<1x128xi32>
    %20 = arith.addi %9, %19 : vector<1x128xi32>
    %21 = arith.select %18, %20, %9 : vector<1x128xi1>, vector<1x128xi32>
    %c0_i32_8 = arith.constant 0 : i32
    %22 = vector.broadcast %c0_i32_8 : i32 to vector<1x128xi32>
    %23 = arith.cmpi eq, %21, %22 : vector<1x128xi32>
    %cst = arith.constant 0.000000e+00 : f32
    %24 = vector.broadcast %cst : f32 to vector<8x128xf32>
    %25 = arith.maximumf %3, %24 : vector<8x128xf32>
    %26 = arith.mulf %3, %4 : vector<8x128xf32>
    %27 = arith.subf %25, %26 : vector<8x128xf32>
    %28 = math.absf %3 : vector<8x128xf32>
    %cst_9 = arith.constant 0.000000e+00 : f32
    %29 = vector.broadcast %cst_9 : f32 to vector<8x128xf32>
    %30 = arith.subf %29, %28 : vector<8x128xf32>
    %31 = math.exp %30 : vector<8x128xf32>
    %32 = math.log1p %31 : vector<8x128xf32>
    %33 = arith.addf %27, %32 : vector<8x128xf32>
    %34 = arith.subf %3, %4 : vector<8x128xf32>
    %35 = arith.mulf %34, %34 : vector<8x128xf32>
    %cst_10 = arith.constant 0.333333343 : f32
    %36 = vector.broadcast %cst_10 : f32 to vector<8x128xf32>
    %37 = arith.mulf %35, %36 : vector<8x128xf32>
    %38 = vector.shape_cast %23 : vector<1x128xi1> to vector<1x128xi1>
    %39 = vector.broadcast %38 : vector<1x128xi1> to vector<8x128xi1>
    %40 = arith.select %39, %33, %37 : vector<8x128xi1>, vector<8x128xf32>
    %c1_i32_11 = arith.constant 1 : i32
    %41 = arith.muli %arg0, %c1_i32_11 : i32
    %42 = arith.addi %41, %arg1 : i32
    %c0_i32_12 = arith.constant 0 : i32
    %43 = arith.cmpi slt, %42, %c0_i32_12 : i32
    %44 = arith.extui %43 : i1 to i32
    %c0_i32_13 = arith.constant 0 : i32
    %45 = arith.cmpi ne, %44, %c0_i32_13 : i32
    scf.if %45 {
      %c0_18 = arith.constant 0 : index
      %c0_19 = arith.constant 0 : index
      %52 = vector.load %arg5[%c0_18, %c0_19] : memref<8x128xf32, #tpu.memory_space<vmem>>, vector<8x128xf32>
      %53 = arith.addf %52, %40 : vector<8x128xf32>
      %c0_20 = arith.constant 0 : index
      %c0_21 = arith.constant 0 : index
      %54 = vector.load %arg5[%c0_20, %c0_21] : memref<8x128xf32, #tpu.memory_space<vmem>>, vector<8x128xf32>
      tpu.vector_store %arg5[%c0_20, %c0_21], %53 {strides = array<i32>} : memref<8x128xf32, #tpu.memory_space<vmem>>, vector<8x128xf32>,
    } else {
    }
    %c0_i32_14 = arith.constant 0 : i32
    %46 = arith.cmpi sge, %42, %c0_i32_14 : i32
    %47 = arith.extui %46 : i1 to i32
    %c0_i32_15 = arith.constant 0 : i32
    %48 = arith.cmpi ne, %47, %c0_i32_15 : i32
    scf.if %48 {
      %52 = tpu.iota {dimensions = array<i32: 0>} : vector<8x128xi32>
      %53 = tpu.iota {dimensions = array<i32: 1>} : vector<8x128xi32>
      %c8_i32 = arith.constant 8 : i32
      %54 = arith.muli %42, %c8_i32 : i32
      %55 = vector.broadcast %54 : i32 to vector<8x128xi32>
      %56 = arith.addi %55, %52 : vector<8x128xi32>
      %c128_i32 = arith.constant 128 : i32
      %57 = vector.broadcast %c128_i32 : i32 to vector<8x128xi32>
      %58 = arith.muli %56, %57 : vector<8x128xi32>
      %59 = arith.addi %58, %53 : vector<8x128xi32>
      %c64_i32 = arith.constant 64 : i32
      %60 = vector.broadcast %c64_i32 : i32 to vector<8x128xi32>
      %61 = arith.cmpi slt, %59, %60 : vector<8x128xi32>
      %cst_18 = arith.constant 0.000000e+00 : f32
      %62 = vector.broadcast %cst_18 : f32 to vector<8x128xf32>
      %63 = arith.select %61, %40, %62 : vector<8x128xi1>, vector<8x128xf32>
      %c0_19 = arith.constant 0 : index
      %c0_20 = arith.constant 0 : index
      %64 = vector.load %arg5[%c0_19, %c0_20] : memref<8x128xf32, #tpu.memory_space<vmem>>, vector<8x128xf32>
      %65 = arith.addf %64, %63 : vector<8x128xf32>
      %c0_21 = arith.constant 0 : index
      %c0_22 = arith.constant 0 : index
      %66 = vector.load %arg5[%c0_21, %c0_22] : memref<8x128xf32, #tpu.memory_space<vmem>>, vector<8x128xf32>
      tpu.vector_store %arg5[%c0_21, %c0_22], %65 {strides = array<i32>} : memref<8x128xf32, #tpu.memory_space<vmem>>, vector<8x128xf32>,
    } else {
    }
    %c0_i32_16 = arith.constant 0 : i32
    %49 = arith.cmpi eq, %arg1, %c0_i32_16 : i32
    %50 = arith.extui %49 : i1 to i32
    %c0_i32_17 = arith.constant 0 : i32
    %51 = arith.cmpi ne, %50, %c0_i32_17 : i32
    scf.if %51 {
      %c0_18 = arith.constant 0 : index
      %c0_19 = arith.constant 0 : index
      %52 = vector.load %arg5[%c0_18, %c0_19] : memref<8x128xf32, #tpu.memory_space<vmem>>, vector<8x128xf32>
      %53 = vector.shape_cast %52 : vector<8x128xf32> to vector<1x8x128xf32>
      %cst_20 = arith.constant dense<0.000000e+00> : vector<1xf32>
      %54 = vector.multi_reduction <add>, %53, %cst_20 [1, 2] : vector<1x8x128xf32> to vector<1xf32>
      %55 = vector.shape_cast %54 : vector<1xf32> to vector<1x1x1xf32>
      %56 = vector.extract %55[0, 0, 0] : f32 from vector<1x1x1xf32>
      %cst_21 = arith.constant 3.125000e-02 : f32
      %57 = arith.mulf %56, %cst_21 : f32
      %c0_22 = arith.constant 0 : index
      %c0_23 = arith.constant 0 : index
      %58 = memref.load %arg4[%c0_22, %c0_23] : memref<1x1xf32, #tpu.memory_space<smem>>
      memref.store %57, %arg4[%c0_22, %c0_23] : memref<1x1xf32, #tpu.memory_space<smem>>
    } else {
    }
    return
  }
  func.func @transform_0(%arg0: i32, %arg1: i32) -> (i32, i32) {
    %c1_i32 = arith.constant 1 : i32
    %0 = arith.muli %arg0, %c1_i32 : i32
    %1 = arith.addi %0, %arg1 : i32
    %c0_i32 = arith.constant 0 : i32
    %c0_i32_0 = arith.constant 0 : i32
    return %1, %c0_i32 : i32, i32
  }
  func.func @transform_1(%arg0: i32, %arg1: i32) -> (i32, i32) {
    %c1_i32 = arith.constant 1 : i32
    %0 = arith.muli %arg0, %c1_i32 : i32
    %1 = arith.addi %0, %arg1 : i32
    %c0_i32 = arith.constant 0 : i32
    %c0_i32_0 = arith.constant 0 : i32
    return %1, %c0_i32 : i32, i32
  }
  func.func @transform_2(%arg0: i32, %arg1: i32) -> (i32, i32) {
    %c0_i32 = arith.constant 0 : i32
    %c0_i32_0 = arith.constant 0 : i32
    return %arg0, %c0_i32 : i32, i32
  }
}

</mosaic_0001>

<llo_original>
// kernel: tpu_custom_call.1
$region0: #{tpu_custom_call.1}
  #allocation0 [shape = 'u32[]', space=smem, size = 0x4, offset = 0x4, fixed_abs, tag = 'smem constant byte address 0x4 - core index']
  #allocation1 [shape = 'u32[72,128]{1,0:T(1,128)}', space=vmem, size = 0x9000, scoped, tag = 'internal scratch']
  #allocation2 [shape = 'f32[8,128]{1,0:T(8,128)}', space=vmem, size = 0x1000, scoped, tag = 'scratch operand']
  %s0 = inlined_call_operand.hbm [shape: f32[8,128], index: 0, kind: input, shape index: {}]
  %s1 = inlined_call_operand.hbm [shape: f32[8,128], index: 1, kind: input, shape index: {}]
  %s2 = inlined_call_operand.hbm [shape: f32[1,1], index: 2, kind: output, shape index: {}]
  %s3 = sld [smem:[#allocation0]]
  $region42: #{tpu_custom_call.1} parent=0
    _
  %s5 = ssub.s32 1, %s3
  %s6 = scalar_select 0, %s5, %s3
  $region1: #{tpu_custom_call.1} parent=0
    #allocation3 [shape = 'u8[4096]{0}', space=vmem, size = 0x1000, scoped, tag = 'input window, operand 0, single buffered']
    #allocation4 [shape = 's32[1]{0}', space=sflag, size = 0x4, scoped, tag = 'scoped memory for tpu_custom_call.1']
    #allocation5 [shape = 's32[1]{0}', space=sflag, size = 0x4, scoped, tag = 'scoped memory for tpu_custom_call.1']
    #allocation6 [shape = 'u8[4096]{0}', space=vmem, size = 0x1000, scoped, tag = 'input window, operand 1, single buffered']
    #allocation7 [shape = 's32[1]{0}', space=sflag, size = 0x4, scoped, tag = 'scoped memory for tpu_custom_call.1']
    #allocation8 [shape = 'u8[512]{0}', space=smem, size = 0x200, scoped, tag = 'output window, operand 0, single buffered']
    %7 = vsyncpa [#allocation4], 0
    %8 = vsyncpa [#allocation7], 0
    %9 = vsyncpa [#allocation5], 0
    // Predicated region
    $region2: #{tpu_custom_call.1} parent=1 // pred_check
      _
    $region3: #{tpu_custom_call.1} parent=1 // pred_check_branch
      %11 = sbr.rel (0) target = $region5
    $region4: #{tpu_custom_call.1} parent=1 // pred_region
      %s12 = sadd.s32 0, 0
      %14 = vsyncadd [#allocation4], 0
      %s15 = smul.addr %s12, 8
      %s16 = scalar_lea.hbm %s0, %s15
      %s18 = sshll.u32 %s16, 4
      %s19 = int_to_ptr.hbm [resolvable:$true] %s18
      %s20 = sshll.u32 [#allocation3], 4
      %s21 = int_to_ptr.vmem [resolvable:$true] %s20
      %23 = dma.hbm_to_vmem [thread:$0]  %s19, 128, %s21, [#allocation4]
    $region5: #{tpu_custom_call.1} parent=1 // pred_fallthru
      _
    // Predicated region
    $region6: #{tpu_custom_call.1} parent=1 // pred_check
      _
    $region7: #{tpu_custom_call.1} parent=1 // pred_check_branch
      %25 = sbr.rel (0) target = $region9
    $region8: #{tpu_custom_call.1} parent=1 // pred_region
      %s26 = sadd.s32 0, 0
      %28 = vsyncadd [#allocation7], 0
      %s29 = smul.addr %s26, 8
      %s30 = scalar_lea.hbm %s1, %s29
      %s32 = sshll.u32 %s30, 4
      %s33 = int_to_ptr.hbm [resolvable:$true] %s32
      %s34 = sshll.u32 [#allocation6], 4
      %s35 = int_to_ptr.vmem [resolvable:$true] %s34
      %37 = dma.hbm_to_vmem [thread:$0]  %s33, 128, %s35, [#allocation7]
    $region9: #{tpu_custom_call.1} parent=1 // pred_fallthru
      _
    // Predicated region
    $region10: #{tpu_custom_call.1} parent=1 // pred_check
      _
    $region11: #{tpu_custom_call.1} parent=1 // pred_check_branch
      %39 = sbr.rel (0) target = $region13
    $region12: #{tpu_custom_call.1} parent=1 // pred_region
      %41 = dma.done [#allocation4], 128
    $region13: #{tpu_custom_call.1} parent=1 // pred_fallthru
      _
    // Predicated region
    $region14: #{tpu_custom_call.1} parent=1 // pred_check
      _
    $region15: #{tpu_custom_call.1} parent=1 // pred_check_branch
      %43 = sbr.rel (0) target = $region17
    $region16: #{tpu_custom_call.1} parent=1 // pred_region
      %45 = dma.done [#allocation7], 128
    $region17: #{tpu_custom_call.1} parent=1 // pred_fallthru
      _
    %s46 = sadd.s32 0, 0
    %s47 = sadd.s32 0, 0
    %p48 = scmp.eq.s32.totalorder 0, 0
    // Predicated region
    $region18: #{tpu_custom_call.1} parent=1 // pred_check
      %p49 = pneg %p48
    $region19: #{tpu_custom_call.1} parent=1 // pred_check_branch
      %51 = sbr.rel (%p49) target = $region21
    $region20: #{tpu_custom_call.1} parent=1 // pred_region
      %52 = vst [vmem:[#allocation2] sm:$0xff] 0.0
    $region21: #{tpu_custom_call.1} parent=1 // pred_fallthru
      _
    %v53 = vld [vmem:[#allocation3] sm:$0xff]
    %v54 = vld [vmem:[#allocation6] sm:$0xff]
    %v55 = vlaneseq
    %v56 = vand.u32 %v55, 127
    %vm57 = vcmp.lt.s32.totalorder %v56, 0
    %v58 = vsub.s32 0, %v56
    %v59 = vsel %vm57, %v58, %v56
    %v60 = vshrl.u32 %v59, 2
    %v61 = vand.u32 %v59, 3
    %v62 = vsub.s32 0, %v61
    %v63 = vsel %vm57, %v62, %v61
    %vm64 = vcmp.ne.s32.totalorder %v63, 0
    %vm65 = vcmp.lt.s32.totalorder %v63, 0
    %vm66 = vmand %vm65, %vm64
    %v67 = vadd.s32 %v63, 4
    %v68 = vsel %vm66, %v67, %v63
    %vm69 = vcmp.eq.s32.totalorder %v68, 0
    %v70 = vmax.f32 %v53, 0.0
    %v71 = vmul.f32 %v53, %v54
    %v72 = vsub.f32 %v70, %v71
    %v73 = vand.u32 2147483647, %v53
    %v74 = vsub.f32 0.0, %v73
    %v75 = vmul.f32 %v74, 1.442695
    %v76 = vpow.pop %v75
    %v77 = vadd.f32 %v76, 1.0
    %v78 = vlog2.pop %v77
    %v79 = vmul.f32 %v78, 0.6931472
    %v80 = vmul.f32 -0.5, %v76
    %v81 = vadd.f32 %v80, 1.0
    %v82 = vmul.f32 %v81, %v76
    %v83 = vand.u32 2147483647, %v76
    %vm84 = vcmp.lt.f32.partialorder %v83, 0.0004427343
    %v85 = vsel %vm84, %v82, %v79
    %v86 = vadd.f32 %v72, %v85
    %v87 = vsub.f32 %v53, %v54
    %v88 = vmul.f32 %v87, %v87
    %v89 = vmul.f32 %v88, 0.33333334
    %v90 = vsel %vm69, 1, 0
    %vm91 = vcmp.eq.s32.totalorder %v90, 1
    %v92 = vsel %vm91, %v86, %v89
    %s93 = sadd.s32 0, 0
    %p94 = scmp.lt.s32.totalorder %s93, 0
    // Predicated region
    $region22: #{tpu_custom_call.1} parent=1 // pred_check
      %p95 = pneg %p94
    $region23: #{tpu_custom_call.1} parent=1 // pred_check_branch
      %97 = sbr.rel (%p95) target = $region25
    $region24: #{tpu_custom_call.1} parent=1 // pred_region
      %v98 = vld [vmem:[#allocation2] sm:$0xff]
      %v99 = vadd.f32 %v98, %v92
      %100 = vst [vmem:[#allocation2] sm:$0xff] %v99
    $region25: #{tpu_custom_call.1} parent=1 // pred_fallthru
      _
    %p101 = scmp.ge.s32.totalorder %s93, 0
    // Predicated region
    $region26: #{tpu_custom_call.1} parent=1 // pred_check
      %p102 = pneg %p101
    $region27: #{tpu_custom_call.1} parent=1 // pred_check_branch
      %104 = sbr.rel (%p102) target = $region29
    $region28: #{tpu_custom_call.1} parent=1 // pred_region
      %v105 = vlaneseq
      %v106 = vshrl.u32 %v105, 7
      %s107 = smul.u32 %s93, 8
      %v108 = vstv %s107
      %v109 = vadd.s32 %v108, %v106
      %v110 = vmul.u32 %v109, 128
      %v111 = vadd.s32 %v110, %v56
      %vm112 = vcmp.lt.s32.totalorder %v111, 64
      %v113 = vsel %vm112, %v92, 0.0
      %v114 = vld [vmem:[#allocation2] sm:$0xff]
      %v115 = vadd.f32 %v114, %v113
      %116 = vst [vmem:[#allocation2] sm:$0xff] %v115
    $region29: #{tpu_custom_call.1} parent=1 // pred_fallthru
      _
    // Predicated region
    $region30: #{tpu_custom_call.1} parent=1 // pred_check
      %p117 = pneg %p48
    $region31: #{tpu_custom_call.1} parent=1 // pred_check_branch
      %119 = sbr.rel (%p117) target = $region33
    $region32: #{tpu_custom_call.1} parent=1 // pred_region
      %v120 = vld [vmem:[#allocation2] sm:$0xff]
      %121 = vadd.xlane.f32.xlu0 %v120
      %v122 = vpop.xlane.xlu0 %121
      %v123 = vrot.slane %v122, 4
      %v124 = vadd.f32 %v122, %v123
      %v125 = vrot.slane %v124, 2
      %v126 = vadd.f32 %v124, %v125
      %v127 = vrot.slane %v126, 1
      %v128 = vadd.f32 %v126, %v127
      %s129 = vtos %v128
      %s130 = smul.f32 %s129, 0.03125
      %s131 = scalar_lea.smem [#allocation8], 0
      %132 = sst [smem:[%s131]] %s130
    $region33: #{tpu_custom_call.1} parent=1 // pred_fallthru
      _
    // Predicated region
    $region34: #{tpu_custom_call.1} parent=1 // pred_check
      _
    $region35: #{tpu_custom_call.1} parent=1 // pred_check_branch
      %134 = sbr.rel (0) target = $region37
    $region36: #{tpu_custom_call.1} parent=1 // pred_region
      %136 = vsyncadd [#allocation5], 0
      %s138 = sshll.u32 %s2, 4
      %s139 = int_to_ptr.hbm [resolvable:$true] %s138
      %141 = dma.smem_to_hbm [#allocation8], 16, %s139, [#allocation5]
    $region37: #{tpu_custom_call.1} parent=1 // pred_fallthru
      _
    // Predicated region
    $region38: #{tpu_custom_call.1} parent=1 // pred_check
      _
    $region39: #{tpu_custom_call.1} parent=1 // pred_check_branch
      %143 = sbr.rel (0) target = $region41
    $region40: #{tpu_custom_call.1} parent=1 // pred_region
      %145 = dma.done [#allocation5], 16
    $region41: #{tpu_custom_call.1} parent=1 // pred_fallthru
      _
    %146 = sfence
    %147 = vsyncpa [#allocation4], 1
    %148 = vsyncpa [#allocation7], 1
    %149 = vsyncpa [#allocation5], 1

</llo_original>
